<compile_context>
chip_gen: v7x
topology: tpu7x:2x2x1
jax: 0.10.0
libtpu: 0.0.40
codegen_flags: <defaults>
</compile_context>

<pallas_src>
import functools

import jax
import jax.numpy as jnp
from jax.experimental import pallas as pl
from jax.experimental.pallas import tpu as pltpu


def _round_up(x, m):
    return (x + m - 1) // m * m


def _pick_spatial_tile(s, rows, itemsize, target_bytes=2 * 1024 * 1024,
                       max_tile=4096):
    """Largest 128-multiple lane tile keeping one (rows, tile) block ~target."""
    full = _round_up(s, 128)
    cap = (target_bytes // max(1, rows * itemsize)) // 128 * 128
    cap = max(128, cap)
    return max(128, min(full, cap, max_tile))


# ---------------------------------------------------------------------------
# Pass 1: streaming global max pool + 1x1 conv + folded eval-BN + ReLU
# ---------------------------------------------------------------------------
def _pool_conv_kernel(x_ref, wt_ref, scale_ref, bias_ref, y_ref, acc_ref,
                      *, s_total, tile_s, mask_tail):
    # x_ref:     (1, C_in, tile_s)  native dtype (lane-dense spatial tile)
    # wt_ref:    (C_in, C_out)      f32 (conv weight, transposed, squeezed)
    # scale_ref: (1, C_out)         f32 (gamma / sqrt(var + eps))
    # bias_ref:  (1, C_out)         f32 (beta - mean * scale)
    # y_ref:     (1, 1, C_out)      f32 (pooled -> conv -> BN -> ReLU)
    # acc_ref:   (1, C_in, tile_s)  native dtype running-max accumulator
    k = pl.program_id(1)

    @pl.when(k == 0)
    def _():
        acc_ref[...] = jnp.full(acc_ref.shape, -jnp.inf, acc_ref.dtype)

    xv = x_ref[...]
    if mask_tail:
        # The last block overhangs S: out-of-bounds lanes hold unspecified
        # data, so force them to -inf (VPU select) so they never win the max.
        lane = jax.lax.broadcasted_iota(jnp.int32, xv.shape, 2)
        valid = (k * tile_s + lane) < s_total
        xv = jnp.where(valid, xv, jnp.asarray(-jnp.inf, xv.dtype))

    # Elementwise running max over spatial tiles: stays on the 4-wide VALU.
    acc_ref[...] = jnp.maximum(acc_ref[...], xv)

    @pl.when(k == pl.num_programs(1) - 1)
    def _():
        # Single small cross-lane reduce on the final accumulator.
        pooled = jnp.max(acc_ref[...], axis=-1).astype(jnp.float32)   # (1, C_in)
        y = jnp.dot(pooled, wt_ref[...],
                    preferred_element_type=jnp.float32)               # (1, C_out)
        y = y * scale_ref[...] + bias_ref[...]
        y_ref[...] = jnp.maximum(y, 0.0).reshape(y_ref.shape)


# ---------------------------------------------------------------------------
# Pass 2: lane-dense broadcast of the 1x1 result over the spatial extent
# ---------------------------------------------------------------------------
def _broadcast_kernel(y_ref, o_ref):
    # y_ref: (1, C_out, 1)       f32
    # o_ref: (1, C_out, tile_o)  output dtype   (full-lane unmasked stores)
    o_ref[...] = jnp.broadcast_to(y_ref[...], o_ref.shape).astype(o_ref.dtype)


def image_pool_forward(x, conv_weight, bn_gamma, bn_beta, bn_mean, bn_var,
                       eps=1e-5):
    """x: (N, C_in, H, W) NCHW.  conv_weight: (C_out, C_in, 1, 1)."""
    N, C_in, H, W = x.shape
    C_out = conv_weight.shape[0]
    S = H * W
    out_dtype = x.dtype

    # Glue: fold eval-mode BN into a per-channel affine; squeeze/transpose W.
    scale = (bn_gamma.astype(jnp.float32)
             / jnp.sqrt(bn_var.astype(jnp.float32) + eps))             # (C_out,)
    bias = bn_beta.astype(jnp.float32) - bn_mean.astype(jnp.float32) * scale
    scale = scale.reshape(1, C_out)
    bias = bias.reshape(1, C_out)
    wt = conv_weight.reshape(C_out, C_in).T.astype(jnp.float32)        # (C_in, C_out)

    # Lane-dense layout: flatten (H, W) -> S (metadata-only reshape).
    x_flat = x.reshape(N, C_in, S)

    itemsize = jnp.dtype(x.dtype).itemsize
    tile_s = _pick_spatial_tile(S, C_in, itemsize)
    n_tiles = pl.cdiv(S, tile_s)
    mask_tail = (S % tile_s) != 0

    vmem_limit = 32 * 1024 * 1024   # safe on v5e/v6e/v7x; blocks sized ~2 MiB

    pool_kernel = functools.partial(
        _pool_conv_kernel, s_total=S, tile_s=tile_s, mask_tail=mask_tail)

    pooled_y = pl.pallas_call(
        pool_kernel,
        out_shape=jax.ShapeDtypeStruct((N, 1, C_out), jnp.float32),
        grid_spec=pltpu.PrefetchScalarGridSpec(
            num_scalar_prefetch=0,
            grid=(N, n_tiles),
            in_specs=[
                pl.BlockSpec((1, C_in, tile_s), lambda i, k: (i, 0, k)),  # x
                pl.BlockSpec((C_in, C_out), lambda i, k: (0, 0)),         # wt
                pl.BlockSpec((1, C_out), lambda i, k: (0, 0)),            # scale
                pl.BlockSpec((1, C_out), lambda i, k: (0, 0)),            # bias
            ],
            out_specs=pl.BlockSpec((1, 1, C_out), lambda i, k: (i, 0, 0)),
            scratch_shapes=[pltpu.VMEM((1, C_in, tile_s), x_flat.dtype)],
        ),
        compiler_params=pltpu.CompilerParams(
            dimension_semantics=("parallel", "arbitrary"),
            vmem_limit_bytes=vmem_limit,
        ),
    )(x_flat, wt, scale, bias)

    # (N, 1, C_out) -> (N, C_out, 1): contiguous, metadata-only; puts C_out on
    # sublanes and spatial on lanes for the broadcast pass.
    y_col = pooled_y.reshape(N, C_out, 1)

    tile_o = _pick_spatial_tile(S, C_out, jnp.dtype(out_dtype).itemsize)
    n_out_tiles = pl.cdiv(S, tile_o)

    out_flat = pl.pallas_call(
        _broadcast_kernel,
        out_shape=jax.ShapeDtypeStruct((N, C_out, S), out_dtype),
        grid_spec=pltpu.PrefetchScalarGridSpec(
            num_scalar_prefetch=0,
            grid=(N, n_out_tiles),
            in_specs=[pl.BlockSpec((1, C_out, 1), lambda i, k: (i, 0, 0))],
            out_specs=pl.BlockSpec((1, C_out, tile_o), lambda i, k: (i, 0, k)),
        ),
        compiler_params=pltpu.CompilerParams(
            dimension_semantics=("parallel", "parallel"),
            vmem_limit_bytes=vmem_limit,
        ),
    )(y_col)

    return out_flat.reshape(N, C_out, H, W)


def reference_forward(x, conv_weight, bn_gamma, bn_beta, bn_mean, bn_var,
                      eps=1e-5):
    """Pure-JAX reference mirroring the PyTorch forward (eval-mode BN)."""
    N, C_in, H, W = x.shape
    C_out = conv_weight.shape[0]
    pooled = jnp.max(x.astype(jnp.float32), axis=(2, 3))               # (N, C_in)
    y = pooled @ conv_weight.reshape(C_out, C_in).T.astype(jnp.float32)
    y = (y - bn_mean) / jnp.sqrt(bn_var + eps) * bn_gamma + bn_beta
    y = jnp.maximum(y, 0.0)
    return jnp.broadcast_to(y[:, :, None, None], (N, C_out, H, W)).astype(x.dtype)


if __name__ == "__main__":
    key = jax.random.PRNGKey(0)
    k_x, k_w, k_g, k_b, k_x2 = jax.random.split(key, 5)

    N, C_in, C_out = 2, 4, 8

    # Deterministic synthetic parameters (shapes from ConvBnReLU.__init__).
    conv_weight = jax.random.normal(k_w, (C_out, C_in, 1, 1), dtype=jnp.float32) * 0.1
    bn_gamma = 1.0 + 0.05 * jax.random.normal(k_g, (C_out,), dtype=jnp.float32)
    bn_beta = 0.05 * jax.random.normal(k_b, (C_out,), dtype=jnp.float32)
    bn_mean = jnp.zeros((C_out,), dtype=jnp.float32)   # fresh BN running stats
    bn_var = jnp.ones((C_out,), dtype=jnp.float32)

    # Case 1: lane-aligned spatial extent (H*W multiple of 128).
    H, W = 16, 16
    x = jax.random.normal(k_x, (N, C_in, H, W), dtype=jnp.float32)
    out = jax.block_until_ready(
        image_pool_forward(x, conv_weight, bn_gamma, bn_beta, bn_mean, bn_var))
    ref = reference_forward(x, conv_weight, bn_gamma, bn_beta, bn_mean, bn_var)
    assert out.shape == (N, C_out, H, W)
    assert jnp.allclose(out, ref, atol=1e-5, rtol=1e-5), "mismatch (aligned)"

    # Case 2: ragged spatial extent (exercises in-kernel -inf tail masking and
    # partial-block output writes; no HBM-side pad/slice copies).
    H2, W2 = 15, 15
    x2 = jax.random.normal(k_x2, (N, C_in, H2, W2), dtype=jnp.float32)
    out2 = jax.block_until_ready(
        image_pool_forward(x2, conv_weight, bn_gamma, bn_beta, bn_mean, bn_var))
    ref2 = reference_forward(x2, conv_weight, bn_gamma, bn_beta, bn_mean, bn_var)
    assert out2.shape == (N, C_out, H2, W2)
    assert jnp.allclose(out2, ref2, atol=1e-5, rtol=1e-5), "mismatch (ragged)"

    print("KERNEL_OK")
</pallas_src>

<mosaic_0001>
module attributes {stable_mosaic.version = 11 : i64} {
  func.func @_pool_conv_kernel(%arg0: i32, %arg1: i32, %arg2: memref<1x4x256xf32, #tpu.memory_space<vmem>>, %arg3: memref<4x8xf32, #tpu.memory_space<vmem>>, %arg4: memref<1x8xf32, #tpu.memory_space<vmem>>, %arg5: memref<1x8xf32, #tpu.memory_space<vmem>>, %arg6: memref<1x1x8xf32, #tpu.memory_space<vmem>>, %arg7: memref<1x4x256xf32, #tpu.memory_space<vmem>>) attributes {dimension_semantics = [#tpu.dimension_semantics<parallel>, #tpu.dimension_semantics<arbitrary>], iteration_bounds = array<i64: 2, 1>, scalar_prefetch = 0 : i64, scratch_operands = 1 : i64, tpu.core_type = #tpu.core_type<tc>, window_params = [{transform_indices = @transform_0, window_bounds = array<i64: 1, 4, 256>}, {pipeline_mode = #tpu.pipeline_mode<synchronous>, transform_indices = @transform_1, window_bounds = array<i64: 4, 8>}, {pipeline_mode = #tpu.pipeline_mode<synchronous>, transform_indices = @transform_2, window_bounds = array<i64: 1, 8>}, {pipeline_mode = #tpu.pipeline_mode<synchronous>, transform_indices = @transform_3, window_bounds = array<i64: 1, 8>}, {transform_indices = @transform_4, window_bounds = array<i64: 1, 1, 8>}]} {
    %c0_i32 = arith.constant 0 : i32
    %0 = arith.cmpi eq, %arg1, %c0_i32 : i32
    %1 = arith.extui %0 : i1 to i32
    %c0_i32_0 = arith.constant 0 : i32
    %2 = arith.cmpi ne, %1, %c0_i32_0 : i32
    scf.if %2 {
      %cst = arith.constant 0xFF800000 : f32
      %10 = vector.broadcast %cst : f32 to vector<1x4x256xf32>
      %c0_11 = arith.constant 0 : index
      %c0_12 = arith.constant 0 : index
      %c0_13 = arith.constant 0 : index
      %11 = vector.load %arg7[%c0_11, %c0_12, %c0_13] : memref<1x4x256xf32, #tpu.memory_space<vmem>>, vector<1x4x256xf32>
      tpu.vector_store %arg7[%c0_11, %c0_12, %c0_13], %10 {strides = array<i32>} : memref<1x4x256xf32, #tpu.memory_space<vmem>>, vector<1x4x256xf32>,
    } else {
    }
    %c0 = arith.constant 0 : index
    %c0_1 = arith.constant 0 : index
    %c0_2 = arith.constant 0 : index
    %3 = vector.load %arg2[%c0, %c0_1, %c0_2] : memref<1x4x256xf32, #tpu.memory_space<vmem>>, vector<1x4x256xf32>
    %c0_3 = arith.constant 0 : index
    %c0_4 = arith.constant 0 : index
    %c0_5 = arith.constant 0 : index
    %4 = vector.load %arg7[%c0_3, %c0_4, %c0_5] : memref<1x4x256xf32, #tpu.memory_space<vmem>>, vector<1x4x256xf32>
    %5 = arith.maximumf %4, %3 : vector<1x4x256xf32>
    %c0_6 = arith.constant 0 : index
    %c0_7 = arith.constant 0 : index
    %c0_8 = arith.constant 0 : index
    %6 = vector.load %arg7[%c0_6, %c0_7, %c0_8] : memref<1x4x256xf32, #tpu.memory_space<vmem>>, vector<1x4x256xf32>
    tpu.vector_store %arg7[%c0_6, %c0_7, %c0_8], %5 {strides = array<i32>} : memref<1x4x256xf32, #tpu.memory_space<vmem>>, vector<1x4x256xf32>,
    %c0_i32_9 = arith.constant 0 : i32
    %7 = arith.cmpi eq, %arg1, %c0_i32_9 : i32
    %8 = arith.extui %7 : i1 to i32
    %c0_i32_10 = arith.constant 0 : i32
    %9 = arith.cmpi ne, %8, %c0_i32_10 : i32
    scf.if %9 {
      %c0_11 = arith.constant 0 : index
      %c0_12 = arith.constant 0 : index
      %c0_13 = arith.constant 0 : index
      %10 = vector.load %arg7[%c0_11, %c0_12, %c0_13] : memref<1x4x256xf32, #tpu.memory_space<vmem>>, vector<1x4x256xf32>
      %cst = arith.constant dense<0xFF800000> : vector<1x4xf32>
      %11 = vector.multi_reduction <maximumf>, %10, %cst [2] : vector<1x4x256xf32> to vector<1x4xf32>
      %c0_14 = arith.constant 0 : index
      %c0_15 = arith.constant 0 : index
      %12 = vector.load %arg3[%c0_14, %c0_15] : memref<4x8xf32, #tpu.memory_space<vmem>>, vector<4x8xf32>
      %cst_16 = arith.constant dense<0.000000e+00> : vector<1x8xf32>
      %13 = tpu.matmul %11, %12, %cst_16 {dimension_numbers = #tpu.dot_dimension_numbers<[1], [0], [0], [1], [0, 0, 1, 1], [], []>} : vector<1x4xf32>, vector<4x8xf32>, vector<1x8xf32> -> vector<1x8xf32>
      %c0_17 = arith.constant 0 : index
      %c0_18 = arith.constant 0 : index
      %14 = vector.load %arg4[%c0_17, %c0_18] : memref<1x8xf32, #tpu.memory_space<vmem>>, vector<1x8xf32>
      %15 = arith.mulf %13, %14 : vector<1x8xf32>
      %c0_19 = arith.constant 0 : index
      %c0_20 = arith.constant 0 : index
      %16 = vector.load %arg5[%c0_19, %c0_20] : memref<1x8xf32, #tpu.memory_space<vmem>>, vector<1x8xf32>
      %17 = arith.addf %15, %16 : vector<1x8xf32>
      %cst_21 = arith.constant 0.000000e+00 : f32
      %18 = vector.broadcast %cst_21 : f32 to vector<1x8xf32>
      %19 = arith.maximumf %17, %18 : vector<1x8xf32>
      %20 = vector.shape_cast %19 : vector<1x8xf32> to vector<1x1x8xf32>
      %c0_22 = arith.constant 0 : index
      %c0_23 = arith.constant 0 : index
      %c0_24 = arith.constant 0 : index
      %21 = vector.load %arg6[%c0_22, %c0_23, %c0_24] : memref<1x1x8xf32, #tpu.memory_space<vmem>>, vector<1x1x8xf32>
      tpu.vector_store %arg6[%c0_22, %c0_23, %c0_24], %20 {strides = array<i32>} : memref<1x1x8xf32, #tpu.memory_space<vmem>>, vector<1x1x8xf32>,
    } else {
    }
    return
  }
  func.func @transform_0(%arg0: i32, %arg1: i32) -> (i32, i32, i32) {
    %c0_i32 = arith.constant 0 : i32
    %c0_i32_0 = arith.constant 0 : i32
    return %arg0, %c0_i32, %arg1 : i32, i32, i32
  }
  func.func @transform_1(%arg0: i32, %arg1: i32) -> (i32, i32) {
    %c0_i32 = arith.constant 0 : i32
    %c0_i32_0 = arith.constant 0 : i32
    %c0_i32_1 = arith.constant 0 : i32
    return %c0_i32, %c0_i32_0 : i32, i32
  }
  func.func @transform_2(%arg0: i32, %arg1: i32) -> (i32, i32) {
    %c0_i32 = arith.constant 0 : i32
    %c0_i32_0 = arith.constant 0 : i32
    %c0_i32_1 = arith.constant 0 : i32
    return %c0_i32, %c0_i32_0 : i32, i32
  }
  func.func @transform_3(%arg0: i32, %arg1: i32) -> (i32, i32) {
    %c0_i32 = arith.constant 0 : i32
    %c0_i32_0 = arith.constant 0 : i32
    %c0_i32_1 = arith.constant 0 : i32
    return %c0_i32, %c0_i32_0 : i32, i32
  }
  func.func @transform_4(%arg0: i32, %arg1: i32) -> (i32, i32, i32) {
    %c0_i32 = arith.constant 0 : i32
    %c0_i32_0 = arith.constant 0 : i32
    %c0_i32_1 = arith.constant 0 : i32
    return %arg0, %c0_i32, %c0_i32_0 : i32, i32, i32
  }
}

</mosaic_0001>

<llo_original>
// kernel: tpu_custom_call.1
$region0: #{tpu_custom_call.1}
  #allocation0 [shape = 'u32[]', space=smem, size = 0x4, offset = 0x4, fixed_abs, tag = 'smem constant byte address 0x4 - core index']
  #allocation1 [shape = 'u32[144,128]{1,0:T(1,128)}', space=vmem, size = 0x12000, scoped, tag = 'internal scratch']
  #allocation2 [shape = 'f32[1,4,256]{2,1,0:T(4,128)}', space=vmem, size = 0x1000, scoped, tag = 'scratch operand']
  %s0 = inlined_call_operand.hbm [shape: f32[2,4,256], index: 0, kind: input, shape index: {}]
  %s1 = inlined_call_operand.hbm [shape: f32[4,8], index: 1, kind: input, shape index: {}]
  %s2 = inlined_call_operand.vmem [shape: f32[1,8], index: 2, kind: input, shape index: {}]
  %s3 = inlined_call_operand.vmem [shape: f32[1,8], index: 3, kind: input, shape index: {}]
  %s4 = inlined_call_operand.hbm [shape: f32[2,1,8], index: 4, kind: output, shape index: {}]
  %s5 = sld [smem:[#allocation0]]
  $region65: #{tpu_custom_call.1} parent=0
    _
  %s7 = ssub.s32 1, %s5
  %s8 = scalar_select 0, %s7, %s5
  $region1: #{tpu_custom_call.1} parent=0
    #allocation3 [shape = 'u8[8192]{0}', space=vmem, size = 0x2000, scoped, tag = 'input window, operand 0']
    #allocation4 [shape = 's32[2]{0}', space=sflag, size = 0x8, scoped, tag = 'scoped memory for tpu_custom_call.1']
    #allocation5 [shape = 's32[2]{0}', space=sflag, size = 0x8, scoped, tag = 'scoped memory for tpu_custom_call.1']
    #allocation6 [shape = 'u8[2048]{0}', space=vmem, size = 0x800, scoped, tag = 'input window, operand 1, single buffered']
    #allocation7 [shape = 's32[1]{0}', space=sflag, size = 0x4, scoped, tag = 'scoped memory for tpu_custom_call.1']
    #allocation8 [shape = 'u8[1024]{0}', space=vmem, size = 0x400, scoped, tag = 'output window, operand 0']
    %9 = vsyncpa [#allocation4], 0
    %s10 = scalar_lea.sflag [#allocation4], 1
    %11 = vsyncpa %s10, 0
    %12 = vsyncpa [#allocation7], 0
    %13 = vsyncpa [#allocation5], 0
    %s14 = scalar_lea.sflag [#allocation5], 1
    %15 = vsyncpa %s14, 0
    loop: start=0, step=1, limit=4
    $region2: #{tpu_custom_call.1} parent=1 // loop_pre_header
      _
    $region3: #{tpu_custom_call.1} parent=1 // loop_header
      %s17 = sphi 0, %s21
      %p18 = scmp.ge.s32.totalorder %s17, 4
      %s24 = sphi 0, %s36
      %s25 = sphi 0, %s32
      %s26 = sphi 0, %s24
      %s27 = sphi 0, %s25
      %s28 = sphi 0, %s26
      %s29 = sphi 0, %s27
      %s41 = sphi 0, %s43
      %s44 = sphi 0, %s41
      %s45 = sphi 0, %s44
      %s61 = sphi 0, %s45
      %s65 = sphi 0, %s65
      %s67 = sphi 0, %s65
      %s68 = sphi 0, %s67
      %s82 = sphi 0, %s68
      %s86 = sphi 0, %s86
      %s88 = sphi 0, %s86
      %s89 = sphi 0, %s88
      %s103 = sphi 0, %s89
      %s107 = sphi 0, %s107
      %s109 = sphi 0, %s107
      %s110 = sphi 0, %s109
      %s124 = sphi 0, %s110
      %s130 = sphi 0, %s132
      %s133 = sphi 0, %s130
      %s134 = sphi 0, %s133
      %s150 = sphi 0, %s134
    $region4: #{tpu_custom_call.1} parent=1 // loop_header_branch
      %20 = sbr.rel (%p18) target = $region8
    $region5: #{tpu_custom_call.1} parent=1 // loop_body
      %s22 = ssub.s32 %s17, 1
      %s23 = ssub.s32 %s17, 2
      %s30 = sadd.s32 1, %s25
      %p31 = scmp.ge.s32.totalorder %s30, 1
      %s32 = scalar_select %p31, 0, %s30
      %s33 = sadd.s32 1, %s24
      %s34 = scalar_select %p31, %s33, %s24
      %p35 = scmp.ge.s32.totalorder %s34, 2
      %s36 = scalar_select %p35, 0, %s34
      %s37 = ssub.s32 %s24, %s36
      %s38 = ssub.s32 %s25, %s32
      %s39 = sor.u32 %s37, %s38
      %p40 = scmp.eq.s32.totalorder %s39, 0
      %s42 = sadd.s32 %s41, 1
      %s43 = scalar_select %p40, %s41, %s42
      %p46 = pneg %p40
      %p47 = scmp.eq.s32.totalorder %s17, 1
      %p48 = por %p46, %p47
      %p49 = scmp.ne.s32.totalorder %s41, %s44
      %p50 = scmp.eq.s32.totalorder %s17, 0
      %p51 = por %p49, %p50
      %p52 = scmp.ne.s32.totalorder %s41, %s44
      %p53 = scmp.eq.s32.totalorder %s22, 1
      %p54 = por %p52, %p53
      %p55 = scmp.ne.s32.totalorder %s44, %s45
      %p56 = scmp.eq.s32.totalorder %s22, 0
      %p57 = por %p55, %p56
      %p58 = scmp.ne.s32.totalorder %s44, %s45
      %p59 = scmp.eq.s32.totalorder %s23, 1
      %p60 = por %p58, %p59
      %p62 = scmp.ne.s32.totalorder %s45, %s61
      %p63 = scmp.eq.s32.totalorder %s23, 0
      %p64 = por %p62, %p63
      %s66 = sadd.s32 %s65, 1
      %p69 = scmp.eq.s32.totalorder %s17, 1
      %p70 = scmp.ne.s32.totalorder %s65, %s67
      %p71 = scmp.eq.s32.totalorder %s17, 0
      %p72 = por %p70, %p71
      %p73 = scmp.ne.s32.totalorder %s65, %s67
      %p74 = scmp.eq.s32.totalorder %s22, 1
      %p75 = por %p73, %p74
      %p76 = scmp.ne.s32.totalorder %s67, %s68
      %p77 = scmp.eq.s32.totalorder %s22, 0
      %p78 = por %p76, %p77
      %p79 = scmp.ne.s32.totalorder %s67, %s68
      %p80 = scmp.eq.s32.totalorder %s23, 1
      %p81 = por %p79, %p80
      %p83 = scmp.ne.s32.totalorder %s68, %s82
      %p84 = scmp.eq.s32.totalorder %s23, 0
      %p85 = por %p83, %p84
      %s87 = sadd.s32 %s86, 1
      %p90 = scmp.eq.s32.totalorder %s17, 1
      %p91 = scmp.ne.s32.totalorder %s86, %s88
      %p92 = scmp.eq.s32.totalorder %s17, 0
      %p93 = por %p91, %p92
      %p94 = scmp.ne.s32.totalorder %s86, %s88
      %p95 = scmp.eq.s32.totalorder %s22, 1
      %p96 = por %p94, %p95
      %p97 = scmp.ne.s32.totalorder %s88, %s89
      %p98 = scmp.eq.s32.totalorder %s22, 0
      %p99 = por %p97, %p98
      %p100 = scmp.ne.s32.totalorder %s88, %s89
      %p101 = scmp.eq.s32.totalorder %s23, 1
      %p102 = por %p100, %p101
      %p104 = scmp.ne.s32.totalorder %s89, %s103
      %p105 = scmp.eq.s32.totalorder %s23, 0
      %p106 = por %p104, %p105
      %s108 = sadd.s32 %s107, 1
      %p111 = scmp.eq.s32.totalorder %s17, 1
      %p112 = scmp.ne.s32.totalorder %s107, %s109
      %p113 = scmp.eq.s32.totalorder %s17, 0
      %p114 = por %p112, %p113
      %p115 = scmp.ne.s32.totalorder %s107, %s109
      %p116 = scmp.eq.s32.totalorder %s22, 1
      %p117 = por %p115, %p116
      %p118 = scmp.ne.s32.totalorder %s109, %s110
      %p119 = scmp.eq.s32.totalorder %s22, 0
      %p120 = por %p118, %p119
      %p121 = scmp.ne.s32.totalorder %s109, %s110
      %p122 = scmp.eq.s32.totalorder %s23, 1
      %p123 = por %p121, %p122
      %p125 = scmp.ne.s32.totalorder %s110, %s124
      %p126 = scmp.eq.s32.totalorder %s23, 0
      %p127 = por %p125, %p126
      %s128 = ssub.s32 %s24, %s36
      %p129 = scmp.eq.s32.totalorder %s128, 0
      %s131 = sadd.s32 %s130, 1
      %s132 = scalar_select %p129, %s130, %s131
      %p135 = pneg %p129
      %p136 = scmp.eq.s32.totalorder %s17, 1
      %p137 = por %p135, %p136
      %p138 = scmp.ne.s32.totalorder %s130, %s133
      %p139 = scmp.eq.s32.totalorder %s17, 0
      %p140 = por %p138, %p139
      %p141 = scmp.ne.s32.totalorder %s130, %s133
      %p142 = scmp.eq.s32.totalorder %s22, 1
      %p143 = por %p141, %p142
      %p144 = scmp.ne.s32.totalorder %s133, %s134
      %p145 = scmp.eq.s32.totalorder %s22, 0
      %p146 = por %p144, %p145
      %p147 = scmp.ne.s32.totalorder %s133, %s134
      %p148 = scmp.eq.s32.totalorder %s23, 1
      %p149 = por %p147, %p148
      %p151 = scmp.ne.s32.totalorder %s134, %s150
      %p152 = scmp.eq.s32.totalorder %s23, 0
      %p153 = por %p151, %p152
      %p154 = scmp.le.s32.totalorder 1, %s17
      %p155 = scmp.lt.s32.totalorder %s17, 3
      %p156 = pnand %p154, %p155
      %p157 = pneg %p156
      // Predicated region
      $region9: #{tpu_custom_call.1} parent=5 // pred_check
        _
      $region10: #{tpu_custom_call.1} parent=5 // pred_check_branch
        %159 = sbr.rel (%p156) target = $region12
      $region11: #{tpu_custom_call.1} parent=5 // pred_region
        %s160 = ssub.s32 %s17, 1
        // Predicated region
        $region13: #{tpu_custom_call.1} parent=11 // pred_check
          %p161 = pneg %p78
        $region14: #{tpu_custom_call.1} parent=11 // pred_check_branch
          %163 = sbr.rel (%p161) target = $region16
        $region15: #{tpu_custom_call.1} parent=11 // pred_region
          %s165 = ssub.s32 64, 64
          %166 = vsyncadd [#allocation7], %s165
          %s168 = sshll.u32 [#allocation6], 4
          %s169 = int_to_ptr.vmem [resolvable:$true] %s168
          %171 = dma.hbm_to_vmem [thread:$0]  %s1, 64, %s169, [#allocation7]
        $region16: #{tpu_custom_call.1} parent=11 // pred_fallthru
          _
        // Predicated region
        $region17: #{tpu_custom_call.1} parent=11 // pred_check
          %p172 = pneg %p99
        $region18: #{tpu_custom_call.1} parent=11 // pred_check_branch
          %174 = sbr.rel (%p172) target = $region20
        $region19: #{tpu_custom_call.1} parent=11 // pred_region
          _
        $region20: #{tpu_custom_call.1} parent=11 // pred_fallthru
          _
        // Predicated region
        $region21: #{tpu_custom_call.1} parent=11 // pred_check
          %p175 = pneg %p120
        $region22: #{tpu_custom_call.1} parent=11 // pred_check_branch
          %177 = sbr.rel (%p175) target = $region24
        $region23: #{tpu_custom_call.1} parent=11 // pred_region
          _
        $region24: #{tpu_custom_call.1} parent=11 // pred_fallthru
          _
      $region12: #{tpu_custom_call.1} parent=5 // pred_fallthru
        _
      %p178 = scmp.lt.s32.totalorder %s17, 2
      // Predicated region
      $region25: #{tpu_custom_call.1} parent=5 // pred_check
        %p179 = pneg %p178
      $region26: #{tpu_custom_call.1} parent=5 // pred_check_branch
        %181 = sbr.rel (%p179) target = $region28
      $region27: #{tpu_custom_call.1} parent=5 // pred_region
        // Predicated region
        $region29: #{tpu_custom_call.1} parent=27 // pred_check
          %p182 = pneg %p51
        $region30: #{tpu_custom_call.1} parent=27 // pred_check_branch
          %184 = sbr.rel (%p182) target = $region32
        $region31: #{tpu_custom_call.1} parent=27 // pred_region
          %s185 = sand.u32 %s41, 1
          %s186 = scalar_lea.sflag [#allocation4], %s185
          %s187 = sand.u32 %s41, 1
          %s188 = smul.addr %s187, 8
          %s189 = scalar_lea.vmem [#allocation3], %s188
          %s190 = smul.u32 2, %s25
          %s192 = ssub.s32 128, 128
          %193 = vsyncadd %s186, %s192
          %s194 = smul.addr %s24, 2
          %s195 = sadd.s32 %s190, %s194
          %s196 = smul.addr %s195, 64
          %s197 = scalar_lea.hbm %s0, %s196
          %s199 = sshll.u32 %s189, 4
          %s200 = int_to_ptr.vmem [resolvable:$true] %s199
          %202 = dma.hbm_to_vmem [thread:$0]  %s197, 128, %s200, %s186
        $region32: #{tpu_custom_call.1} parent=27 // pred_fallthru
          _
      $region28: #{tpu_custom_call.1} parent=5 // pred_fallthru
        _
      %p203 = scmp.le.s32.totalorder 1, %s17
      %p204 = scmp.lt.s32.totalorder %s17, 3
      %p205 = pnand %p203, %p204
      %p206 = pneg %p205
      // Predicated region
      $region33: #{tpu_custom_call.1} parent=5 // pred_check
        _
      $region34: #{tpu_custom_call.1} parent=5 // pred_check_branch
        %208 = sbr.rel (%p205) target = $region36
      $region35: #{tpu_custom_call.1} parent=5 // pred_region
        %s209 = ssub.s32 %s17, 1
        %s210 = sand.u32 %s44, 1
        %s211 = scalar_lea.sflag [#allocation4], %s210
        %s212 = sand.u32 %s44, 1
        %s213 = smul.addr %s212, 8
        %s214 = scalar_lea.vmem [#allocation3], %s213
        // Predicated region
        $region37: #{tpu_custom_call.1} parent=35 // pred_check
          %p215 = pneg %p57
        $region38: #{tpu_custom_call.1} parent=35 // pred_check_branch
          %217 = sbr.rel (%p215) target = $region40
        $region39: #{tpu_custom_call.1} parent=35 // pred_region
          %218 = dma.done %s211, 128
        $region40: #{tpu_custom_call.1} parent=35 // pred_fallthru
          _
        // Predicated region
        $region41: #{tpu_custom_call.1} parent=35 // pred_check
          %p219 = pneg %p78
        $region42: #{tpu_custom_call.1} parent=35 // pred_check_branch
          %221 = sbr.rel (%p219) target = $region44
        $region43: #{tpu_custom_call.1} parent=35 // pred_region
          %222 = dma.done [#allocation7], 64
        $region44: #{tpu_custom_call.1} parent=35 // pred_fallthru
          _
        %s223 = sand.u32 %s44, 1
        %s224 = scalar_lea.sflag [#allocation4], %s223
        %s225 = sand.u32 %s44, 1
        %s226 = smul.addr %s225, 8
        %s227 = scalar_lea.vmem [#allocation3], %s226
        %p228 = pneg %p57
        %p229 = pneg %p54
        %p230 = pneg %p78
        %p231 = pneg %p75
        %p232 = pneg %p99
        %p233 = pneg %p96
        %p234 = pneg %p120
        %p235 = pneg %p117
        %p236 = pneg %p146
        %p237 = pneg %p143
        %s238 = sand.u32 %s133, 1
        %s239 = scalar_lea.sflag [#allocation5], %s238
        %s240 = sand.u32 %s133, 1
        %s241 = scalar_lea.vmem [#allocation8], %s240
        %s242 = smul.u32 2, %s27
        %p243 = scmp.eq.s32.totalorder %s27, 0
        // Predicated region
        $region45: #{tpu_custom_call.1} parent=35 // pred_check
          %p244 = pneg %p243
        $region46: #{tpu_custom_call.1} parent=35 // pred_check_branch
          %246 = sbr.rel (%p244) target = $region48
        $region47: #{tpu_custom_call.1} parent=35 // pred_region
          %247 = vst [vmem:[#allocation2] sm:$0xff] -inf
        $region48: #{tpu_custom_call.1} parent=35 // pred_fallthru
          _
        %v248 = vld [vmem:[%s214] sm:$0xff]
        %v249 = vld [vmem:[#allocation2] sm:$0xff]
        %v250 = vmax.f32 %v249, %v248
        %251 = vst [vmem:[#allocation2] sm:$0xff] %v250
        // Predicated region
        $region49: #{tpu_custom_call.1} parent=35 // pred_check
          %p252 = pneg %p243
        $region50: #{tpu_custom_call.1} parent=35 // pred_check_branch
          %254 = sbr.rel (%p252) target = $region52
        $region51: #{tpu_custom_call.1} parent=35 // pred_region
          %v255 = vld [vmem:[#allocation2] sm:$0xff]
          %v257 = vcombine.high %v255, %v255
          %vm259 = vcmask 1043456
          %v260 = vsel %vm259, %v255, -inf
          %v261 = vsel %vm259, %v257, -inf
          %v262 = vmax.f32 %v260, %v261
          %263 = vmax.xlane.f32.xlu0 %v262
          %v264 = vpop.xlane.xlu0 %263
          %v265 = vld [vmem:[#allocation6] sm:$0xf]
          %v267 = vlaneseq
          %v268 = vand.u32 %v267, 127
          %v269 = vlaneseq
          %v270 = vshrl.u32 %v269, 7
          %v271 = vsub.s32 %v268, %v270
          %v272 = vrot.slane %v264, %v271
          %vm273 = vcmask 31744
          %v274 = vsel %vm273, %v272, 0
          %v277 = vsel %vm259, %v265, 0
          %279 = vmatprep.subr.mxu0 0.0
          %280 = vmatpush1.msra.mxu0 %v277
          %281 = vmatprep.subr.mxu0 0.0
          %282 = vmatpush1.msra.mxu0 0.0
          %283 = vmatprep.subr.mxu0 0.0
          %284 = vmatpush1.msra.mxu0 0.0
          %285 = vmatprep.subr.mxu0 0.0
          %286 = vmatpush1.msra.mxu0 0.0
          %287 = vmatprep.subr.mxu0 0.0
          %288 = vmatpush1.msra.mxu0 0.0
          %289 = vmatprep.subr.mxu0 0.0
          %290 = vmatpush1.msra.mxu0 0.0
          %291 = vmatprep.subr.mxu0 0.0
          %292 = vmatpush1.msra.mxu0 0.0
          %293 = vmatprep.subr.mxu0 0.0
          %294 = vmatpush1.msra.mxu0 0.0
          %295 = vmatprep.subr.mxu0 0.0
          %296 = vmatpush1.msra.mxu0 0.0
          %297 = vmatprep.subr.mxu0 0.0
          %298 = vmatpush1.msra.mxu0 0.0
          %299 = vmatprep.subr.mxu0 0.0
          %300 = vmatpush1.msra.mxu0 0.0
          %301 = vmatprep.subr.mxu0 0.0
          %302 = vmatpush1.msra.mxu0 0.0
          %303 = vmatprep.subr.mxu0 0.0
          %304 = vmatpush1.msra.mxu0 0.0
          %305 = vmatprep.subr.mxu0 0.0
          %306 = vmatpush1.msra.mxu0 0.0
          %307 = vmatprep.subr.mxu0 0.0
          %308 = vmatpush1.msra.mxu0 0.0
          %309 = vmatprep.subr.mxu0 0.0
          %310 = vmatpush1.msra.mxu0 0.0
          %311 = vmatprep.subr.mxu0 0.0
          %312 = vmatpush1.msra.mxu0 0.0
          %313 = vmatprep.subr.mxu0 0.0
          %314 = vmatpush1.msra.mxu0 0.0
          %315 = vmatprep.subr.mxu0 0.0
          %316 = vmatpush1.msra.mxu0 0.0
          %317 = vmatprep.subr.mxu0 0.0
          %318 = vmatpush1.msra.mxu0 0.0
          %319 = vmatprep.subr.mxu0 0.0
          %320 = vmatpush1.msra.mxu0 0.0
          %321 = vmatprep.subr.mxu0 0.0
          %322 = vmatpush1.msra.mxu0 0.0
          %323 = vmatprep.subr.mxu0 0.0
          %324 = vmatpush1.msra.mxu0 0.0
          %325 = vmatprep.subr.mxu0 0.0
          %326 = vmatpush1.msra.mxu0 0.0
          %327 = vmatprep.subr.mxu0 0.0
          %328 = vmatpush1.msra.mxu0 0.0
          %329 = vmatprep.subr.mxu0 0.0
          %330 = vmatpush1.msra.mxu0 0.0
          %331 = vmatprep.subr.mxu0 0.0
          %332 = vmatpush1.msra.mxu0 0.0
          %333 = vmatprep.subr.mxu0 0.0
          %334 = vmatpush1.msra.mxu0 0.0
          %335 = vmatprep.subr.mxu0 0.0
          %336 = vmatpush1.msra.mxu0 0.0
          %337 = vmatprep.subr.mxu0 0.0
          %338 = vmatpush1.msra.mxu0 0.0
          %339 = vmatprep.subr.mxu0 0.0
          %340 = vmatpush1.msra.mxu0 0.0
          %341 = vmatprep.subr.mxu0 0.0
          %342 = vmatpush1.msra.mxu0 0.0
          %343 = vmatprep.mubr.f32.mxu0 0.0
          %344 = vmatmul.mubr.f32.gmra.mrb[0].mxu0 %v274
          %v345 = vpop.f32.mrb[0].mxu0
          %v346 = vadd.f32 0.0, %v345
          %v347 = vpop.f32.mrb[0].mxu0
          %348 = vdwg.mxu0
          %v349 = vld [vmem:[%s2] sm:$0x1]
          %v350 = vmul.f32 %v346, %v349
          %v351 = vld [vmem:[%s3] sm:$0x1]
          %v352 = vadd.f32 %v350, %v351
          %v353 = vmax.f32 %v352, 0.0
          %vm354 = vcmask 57344
          %355 = vst.msk [vmem:[%s241] sm:$0x1] %vm354, %v353
        $region52: #{tpu_custom_call.1} parent=35 // pred_fallthru
          _
        %s356 = sand.u32 %s133, 1
        %s357 = scalar_lea.sflag [#allocation5], %s356
        %s358 = sand.u32 %s133, 1
        %s359 = scalar_lea.vmem [#allocation8], %s358
        // Predicated region
        $region53: #{tpu_custom_call.1} parent=35 // pred_check
          %p360 = pneg %p143
        $region54: #{tpu_custom_call.1} parent=35 // pred_check_branch
          %362 = sbr.rel (%p360) target = $region56
        $region55: #{tpu_custom_call.1} parent=35 // pred_region
          %s364 = ssub.s32 16, 16
          %365 = vsyncadd %s357, %s364
          %s366 = smul.addr %s26, 16
          %s367 = scalar_lea.hbm %s4, %s366
          %s369 = sshll.u32 %s359, 4
          %s370 = int_to_ptr.vmem [resolvable:$true] %s369
          %372 = dma.vmem_to_hbm [thread:$0]  %s370, 16, %s367, %s357
        $region56: #{tpu_custom_call.1} parent=35 // pred_fallthru
          _
      $region36: #{tpu_custom_call.1} parent=5 // pred_fallthru
        _
      %p373 = scmp.le.s32.totalorder 2, %s17
      // Predicated region
      $region57: #{tpu_custom_call.1} parent=5 // pred_check
        %p374 = pneg %p373
      $region58: #{tpu_custom_call.1} parent=5 // pred_check_branch
        %376 = sbr.rel (%p374) target = $region60
      $region59: #{tpu_custom_call.1} parent=5 // pred_region
        %s377 = ssub.s32 %s17, 2
        // Predicated region
        $region61: #{tpu_custom_call.1} parent=59 // pred_check
          %p378 = pneg %p149
        $region62: #{tpu_custom_call.1} parent=59 // pred_check_branch
          %380 = sbr.rel (%p378) target = $region64
        $region63: #{tpu_custom_call.1} parent=59 // pred_region
          %s381 = sand.u32 %s134, 1
          %s382 = scalar_lea.sflag [#allocation5], %s381
          %s383 = sand.u32 %s134, 1
          %s384 = scalar_lea.vmem [#allocation8], %s383
          %385 = dma.done %s382, 16
        $region64: #{tpu_custom_call.1} parent=59 // pred_fallthru
          _
      $region60: #{tpu_custom_call.1} parent=5 // pred_fallthru
        _
    $region6: #{tpu_custom_call.1} parent=1 // loop_footer
      %s21 = sadd.s32 1, %s17
    $region7: #{tpu_custom_call.1} parent=1 // loop_footer_branch
      %16 = sbr.rel target = $region3
    $region8: #{tpu_custom_call.1} parent=1 // loop_exit
      _
    %386 = vsyncpa [#allocation4], 1
    %s387 = scalar_lea.sflag [#allocation4], 1
    %388 = vsyncpa %s387, 1
    %389 = vsyncpa [#allocation7], 1
    %390 = vsyncpa [#allocation5], 1
    %s391 = scalar_lea.sflag [#allocation5], 1
    %392 = vsyncpa %s391, 1

</llo_original>
